<compile_context>
chip_gen: v7x
topology: tpu7x:2x2x1
jax: 0.10.0
libtpu: 0.0.40
codegen_flags: <defaults>
</compile_context>

<pallas_src>
import functools

import jax
import jax.numpy as jnp
from jax import lax
from jax.experimental import pallas as pl
from jax.experimental.pallas import tpu as pltpu

EPS = 1e-5
MOMENTUM = 0.9


# ---------------------------------------------------------------------------
# Kernels: NCHW path (channels on sublanes), x block = (TR, C, TL)
# ---------------------------------------------------------------------------
def _stats_kernel_nchw(x_ref, gamma_ref, beta_ref, mmean_ref, mvar_ref,
                       scale_ref, shift_ref, new_mmean_ref, new_mvar_ref,
                       sum_ref, sumsq_ref, *, inv_count, eps, momentum):
    """Streaming per-channel sum / sum-of-squares over (row, lane) tiles."""
    r = pl.program_id(0)
    l = pl.program_id(1)

    @pl.when(jnp.logical_and(r == 0, l == 0))
    def _init():
        sum_ref[...] = jnp.zeros_like(sum_ref)
        sumsq_ref[...] = jnp.zeros_like(sumsq_ref)

    x = x_ref[...].astype(jnp.float32)                    # (TR, C, TL)
    sum_ref[...] += jnp.sum(x, axis=(0, 2))[:, None]      # (C, 1)
    sumsq_ref[...] += jnp.sum(x * x, axis=(0, 2))[:, None]

    @pl.when(jnp.logical_and(r == pl.num_programs(0) - 1,
                             l == pl.num_programs(1) - 1))
    def _finalize():
        mean = sum_ref[...] * inv_count                               # (C, 1)
        var = jnp.maximum(sumsq_ref[...] * inv_count - mean * mean, 0.0)
        scale = gamma_ref[...] * lax.rsqrt(var + eps)                 # once/chan
        scale_ref[...] = scale
        shift_ref[...] = beta_ref[...] - mean * scale
        new_mmean_ref[...] = momentum * mmean_ref[...] + (1.0 - momentum) * mean
        new_mvar_ref[...] = momentum * mvar_ref[...] + (1.0 - momentum) * var


def _apply_kernel_nchw(x_ref, scale_ref, shift_ref, y_ref):
    """y = x * scale + shift   (f32 compute, one FMA/elem)."""
    x = x_ref[...].astype(jnp.float32)                    # (TR, C, TL)
    y = x * scale_ref[...] + shift_ref[...]               # (C, 1) broadcasts
    y_ref[...] = y.astype(y_ref.dtype)


# ---------------------------------------------------------------------------
# Kernels: (N, C) path (channels on lanes), x block = (TN, C)
# ---------------------------------------------------------------------------
def _stats_kernel_nc(x_ref, gamma_ref, beta_ref, mmean_ref, mvar_ref,
                     scale_ref, shift_ref, new_mmean_ref, new_mvar_ref,
                     sum_ref, sumsq_ref, *, inv_count, eps, momentum):
    n = pl.program_id(0)

    @pl.when(n == 0)
    def _init():
        sum_ref[...] = jnp.zeros_like(sum_ref)
        sumsq_ref[...] = jnp.zeros_like(sumsq_ref)

    x = x_ref[...].astype(jnp.float32)                    # (TN, C)
    sum_ref[...] += jnp.sum(x, axis=0, keepdims=True)     # (1, C)
    sumsq_ref[...] += jnp.sum(x * x, axis=0, keepdims=True)

    @pl.when(n == pl.num_programs(0) - 1)
    def _finalize():
        mean = sum_ref[...] * inv_count                               # (1, C)
        var = jnp.maximum(sumsq_ref[...] * inv_count - mean * mean, 0.0)
        scale = gamma_ref[...] * lax.rsqrt(var + eps)
        scale_ref[...] = scale
        shift_ref[...] = beta_ref[...] - mean * scale
        new_mmean_ref[...] = momentum * mmean_ref[...] + (1.0 - momentum) * mean
        new_mvar_ref[...] = momentum * mvar_ref[...] + (1.0 - momentum) * var


def _apply_kernel_nc(x_ref, scale_ref, shift_ref, y_ref):
    x = x_ref[...].astype(jnp.float32)                    # (TN, C)
    y_ref[...] = (x * scale_ref[...] + shift_ref[...]).astype(y_ref.dtype)


# ---------------------------------------------------------------------------
# Tiling / VMEM budgeting
# ---------------------------------------------------------------------------
def _vmem_bytes():
    try:
        info = pltpu.get_tpu_info()
        return int(getattr(info, "vmem_capacity_bytes", 64 << 20))
    except Exception:
        return 64 << 20        # conservative default (v7x per-TC VMEM)


def _vmem_budget_and_limit():
    vmem = _vmem_bytes()
    # Per-block f32 budget: double-buffered x-in + y-out must fit with ample
    # headroom even on the smallest chip (v7x: 64 MiB physical VMEM).
    budget = max(1 << 20, min(vmem // 32, 8 << 20))
    vmem_limit = int(min(max(vmem * 3 // 4, 32 << 20), 96 << 20))
    return budget, vmem_limit


def _pick_tiles_nchw(R, C, L):
    """Pick (row_tile, lane_tile, vmem_limit_bytes) for the (R, C, L) layout."""
    budget, vmem_limit = _vmem_budget_and_limit()
    bytes_per_col = max(C, 8) * 4                # channels pad to 8 sublanes

    # Lane tile: dense multiple of 128 that divides L, else full extent.
    if L % 128 != 0:
        tl = L
    else:
        max_tl = max(128, (budget // bytes_per_col) // 128 * 128)
        if L <= max_tl:
            tl = L
        else:
            tl = 128
            cand = min(max_tl, L)
            while cand >= 128:
                if L % cand == 0:
                    tl = cand
                    break
                cand -= 128

    # Row tile: largest divisor of R keeping the block inside the budget.
    block_bytes = bytes_per_col * tl
    tr = 1
    cand = min(max(1, budget // block_bytes), R)
    while cand >= 1:
        if R % cand == 0:
            tr = cand
            break
        cand -= 1
    return tr, tl, vmem_limit


def _pick_tiles_nc(N, C):
    """Pick (row_tile, vmem_limit_bytes) for the channels-last (N, C) layout."""
    budget, vmem_limit = _vmem_budget_and_limit()
    bytes_per_row = max(((C + 127) // 128) * 128, 128) * 4
    tn = 1
    cand = min(max(1, budget // bytes_per_row), N)
    while cand >= 1:
        if N % cand == 0:
            tn = cand
            break
        cand -= 1
    return tn, vmem_limit


# ---------------------------------------------------------------------------
# pallas_call wrappers
# ---------------------------------------------------------------------------
def _bn_stats_nchw(x3, gamma, beta, mmean, mvar, tr, tl, eps, momentum, vmem_limit):
    R, C, L = x3.shape
    inv_count = 1.0 / float(R * L)
    vec_spec = pl.BlockSpec((C, 1), lambda r, l: (0, 0))
    kernel = functools.partial(_stats_kernel_nchw, inv_count=inv_count,
                               eps=eps, momentum=momentum)
    return pl.pallas_call(
        kernel,
        out_shape=(
            jax.ShapeDtypeStruct((C, 1), jnp.float32),   # scale
            jax.ShapeDtypeStruct((C, 1), jnp.float32),   # shift
            jax.ShapeDtypeStruct((C, 1), jnp.float32),   # new moving mean
            jax.ShapeDtypeStruct((C, 1), jnp.float32),   # new moving var
        ),
        grid=(R // tr, L // tl),
        in_specs=[
            pl.BlockSpec((tr, C, tl), lambda r, l: (r, 0, l)),
            vec_spec, vec_spec, vec_spec, vec_spec,
        ],
        out_specs=(vec_spec, vec_spec, vec_spec, vec_spec),
        scratch_shapes=[
            pltpu.VMEM((C, 1), jnp.float32),
            pltpu.VMEM((C, 1), jnp.float32),
        ],
        compiler_params=pltpu.CompilerParams(
            dimension_semantics=("arbitrary", "arbitrary"),
            vmem_limit_bytes=vmem_limit),
    )(x3, gamma, beta, mmean, mvar)


def _bn_apply_nchw(x3, scale, shift, tr, tl, vmem_limit):
    R, C, L = x3.shape
    vec_spec = pl.BlockSpec((C, 1), lambda r, l: (0, 0))
    return pl.pallas_call(
        _apply_kernel_nchw,
        out_shape=jax.ShapeDtypeStruct((R, C, L), x3.dtype),
        grid=(R // tr, L // tl),
        in_specs=[
            pl.BlockSpec((tr, C, tl), lambda r, l: (r, 0, l)),
            vec_spec, vec_spec,
        ],
        out_specs=pl.BlockSpec((tr, C, tl), lambda r, l: (r, 0, l)),
        compiler_params=pltpu.CompilerParams(
            dimension_semantics=("parallel", "parallel"),
            vmem_limit_bytes=vmem_limit),
    )(x3, scale, shift)


def _bn_stats_nc(x2, gamma, beta, mmean, mvar, tn, eps, momentum, vmem_limit):
    N, C = x2.shape
    inv_count = 1.0 / float(N)
    vec_spec = pl.BlockSpec((1, C), lambda n: (0, 0))
    kernel = functools.partial(_stats_kernel_nc, inv_count=inv_count,
                               eps=eps, momentum=momentum)
    return pl.pallas_call(
        kernel,
        out_shape=(
            jax.ShapeDtypeStruct((1, C), jnp.float32),   # scale
            jax.ShapeDtypeStruct((1, C), jnp.float32),   # shift
            jax.ShapeDtypeStruct((1, C), jnp.float32),   # new moving mean
            jax.ShapeDtypeStruct((1, C), jnp.float32),   # new moving var
        ),
        grid=(N // tn,),
        in_specs=[
            pl.BlockSpec((tn, C), lambda n: (n, 0)),
            vec_spec, vec_spec, vec_spec, vec_spec,
        ],
        out_specs=(vec_spec, vec_spec, vec_spec, vec_spec),
        scratch_shapes=[
            pltpu.VMEM((1, C), jnp.float32),
            pltpu.VMEM((1, C), jnp.float32),
        ],
        compiler_params=pltpu.CompilerParams(
            dimension_semantics=("arbitrary",),
            vmem_limit_bytes=vmem_limit),
    )(x2, gamma, beta, mmean, mvar)


def _bn_apply_nc(x2, scale, shift, tn, vmem_limit):
    N, C = x2.shape
    vec_spec = pl.BlockSpec((1, C), lambda n: (0, 0))
    return pl.pallas_call(
        _apply_kernel_nc,
        out_shape=jax.ShapeDtypeStruct((N, C), x2.dtype),
        grid=(N // tn,),
        in_specs=[
            pl.BlockSpec((tn, C), lambda n: (n, 0)),
            vec_spec, vec_spec,
        ],
        out_specs=pl.BlockSpec((tn, C), lambda n: (n, 0)),
        compiler_params=pltpu.CompilerParams(
            dimension_semantics=("parallel",),
            vmem_limit_bytes=vmem_limit),
    )(x2, scale, shift)


# ---------------------------------------------------------------------------
# Public forward
# ---------------------------------------------------------------------------
def batch_norm_forward(x, gamma, beta, moving_mean, moving_var,
                       eps=EPS, momentum=MOMENTUM):
    """Training-mode BatchNorm forward.

    x: (N, C) or NCHW (N, C, H, W).  gamma/beta/moving stats: (1, C) or
    (1, C, 1, 1).  Returns (Y, new_moving_mean, new_moving_var) with the same
    shapes as the inputs.
    """
    assert x.ndim in (2, 4)

    if x.ndim == 4:
        n, c, h, w = x.shape
        x3 = x.reshape(n, c, h * w)                 # pure reshape, no transpose
        gamma_v = gamma.reshape(c, 1).astype(jnp.float32)
        beta_v = beta.reshape(c, 1).astype(jnp.float32)
        mm_v = moving_mean.reshape(c, 1).astype(jnp.float32)
        mv_v = moving_var.reshape(c, 1).astype(jnp.float32)

        tr, tl, vmem_limit = _pick_tiles_nchw(n, c, h * w)
        scale, shift, new_mm, new_mv = _bn_stats_nchw(
            x3, gamma_v, beta_v, mm_v, mv_v, tr, tl, eps, momentum, vmem_limit)
        y3 = _bn_apply_nchw(x3, scale, shift, tr, tl, vmem_limit)

        y = y3.reshape(n, c, h, w)
        return y, new_mm.reshape(1, c, 1, 1), new_mv.reshape(1, c, 1, 1)

    # 2-D (N, C): channels already last -> no HBM transpose needed.
    n, c = x.shape
    gamma_v = gamma.reshape(1, c).astype(jnp.float32)
    beta_v = beta.reshape(1, c).astype(jnp.float32)
    mm_v = moving_mean.reshape(1, c).astype(jnp.float32)
    mv_v = moving_var.reshape(1, c).astype(jnp.float32)

    tn, vmem_limit = _pick_tiles_nc(n, c)
    scale, shift, new_mm, new_mv = _bn_stats_nc(
        x, gamma_v, beta_v, mm_v, mv_v, tn, eps, momentum, vmem_limit)
    y = _bn_apply_nc(x, scale, shift, tn, vmem_limit)
    return y, new_mm.reshape(1, c), new_mv.reshape(1, c)


class BatchNorm:
    """JAX port of the PyTorch BatchNorm module (forward only, training mode)."""

    def __init__(self, num_dims, num_features):
        shape = (1, num_features) if num_dims == 2 else (1, num_features, 1, 1)
        self.gamma = jnp.ones(shape, jnp.float32)
        self.beta = jnp.zeros(shape, jnp.float32)
        self.moving_mean = jnp.zeros(shape, jnp.float32)
        self.moving_var = jnp.ones(shape, jnp.float32)

    def __call__(self, x):
        y, self.moving_mean, self.moving_var = batch_norm_forward(
            x, self.gamma, self.beta, self.moving_mean, self.moving_var)
        return y


def _reference(x, gamma, beta, moving_mean, moving_var, eps=EPS, momentum=MOMENTUM):
    # Pure-JAX reference mirroring the PyTorch batch_norm (training branch).
    if x.ndim == 2:
        mean = x.mean(axis=0)
        var = ((x - mean) ** 2).mean(axis=0)
    else:
        mean = x.mean(axis=(0, 2, 3), keepdims=True)
        var = ((x - mean) ** 2).mean(axis=(0, 2, 3), keepdims=True)
    x_hat = (x - mean) / jnp.sqrt(var + eps)
    y = gamma * x_hat + beta
    new_mm = momentum * moving_mean + (1 - momentum) * mean.reshape(moving_mean.shape)
    new_mv = momentum * moving_var + (1 - momentum) * var.reshape(moving_var.shape)
    return y, new_mm, new_mv


if __name__ == "__main__":
    key = jax.random.PRNGKey(0)
    N, C, H, W = 2, 4, 16, 16
    x = jax.random.normal(key, (N, C, H, W), dtype=jnp.float32)

    bn = BatchNorm(num_dims=4, num_features=C)
    y = jax.block_until_ready(bn(x))
    mm = jax.block_until_ready(bn.moving_mean)
    mv = jax.block_until_ready(bn.moving_var)

    y_ref, mm_ref, mv_ref = _reference(
        x, jnp.ones((1, C, 1, 1)), jnp.zeros((1, C, 1, 1)),
        jnp.zeros((1, C, 1, 1)), jnp.ones((1, C, 1, 1)))
    assert jnp.allclose(y, y_ref, atol=1e-4, rtol=1e-4)
    assert jnp.allclose(mm, mm_ref, atol=1e-5, rtol=1e-5)
    assert jnp.allclose(mv, mv_ref, atol=1e-5, rtol=1e-5)

    # Also exercise the 2-D (N, C) path (channels-last kernels, no transpose).
    x2 = jax.random.normal(jax.random.PRNGKey(1), (8, 32), dtype=jnp.float32)
    bn2 = BatchNorm(num_dims=2, num_features=32)
    y2 = jax.block_until_ready(bn2(x2))
    y2_ref, mm2_ref, mv2_ref = _reference(
        x2, jnp.ones((1, 32)), jnp.zeros((1, 32)),
        jnp.zeros((1, 32)), jnp.ones((1, 32)))
    assert jnp.allclose(y2, y2_ref, atol=1e-4, rtol=1e-4)
    assert jnp.allclose(bn2.moving_mean, mm2_ref, atol=1e-5, rtol=1e-5)
    assert jnp.allclose(bn2.moving_var, mv2_ref, atol=1e-5, rtol=1e-5)

    print("KERNEL_OK")
</pallas_src>

<mosaic_0001>
module attributes {stable_mosaic.version = 11 : i64} {
  func.func @_stats_kernel_nchw(%arg0: i32, %arg1: i32, %arg2: memref<2x4x256xf32, #tpu.memory_space<vmem>>, %arg3: memref<4x1xf32, #tpu.memory_space<vmem>>, %arg4: memref<4x1xf32, #tpu.memory_space<vmem>>, %arg5: memref<4x1xf32, #tpu.memory_space<vmem>>, %arg6: memref<4x1xf32, #tpu.memory_space<vmem>>, %arg7: memref<4x1xf32, #tpu.memory_space<vmem>>, %arg8: memref<4x1xf32, #tpu.memory_space<vmem>>, %arg9: memref<4x1xf32, #tpu.memory_space<vmem>>, %arg10: memref<4x1xf32, #tpu.memory_space<vmem>>, %arg11: memref<4x1xf32, #tpu.memory_space<vmem>>, %arg12: memref<4x1xf32, #tpu.memory_space<vmem>>) attributes {dimension_semantics = [#tpu.dimension_semantics<arbitrary>, #tpu.dimension_semantics<arbitrary>], iteration_bounds = array<i64: 1, 1>, scalar_prefetch = 0 : i64, scratch_operands = 2 : i64, tpu.core_type = #tpu.core_type<tc>, window_params = [{transform_indices = @transform_0, window_bounds = array<i64: 2, 4, 256>}, {pipeline_mode = #tpu.pipeline_mode<synchronous>, transform_indices = @transform_1, window_bounds = array<i64: 4, 1>}, {pipeline_mode = #tpu.pipeline_mode<synchronous>, transform_indices = @transform_2, window_bounds = array<i64: 4, 1>}, {pipeline_mode = #tpu.pipeline_mode<synchronous>, transform_indices = @transform_3, window_bounds = array<i64: 4, 1>}, {pipeline_mode = #tpu.pipeline_mode<synchronous>, transform_indices = @transform_4, window_bounds = array<i64: 4, 1>}, {pipeline_mode = #tpu.pipeline_mode<synchronous>, transform_indices = @transform_5, window_bounds = array<i64: 4, 1>}, {pipeline_mode = #tpu.pipeline_mode<synchronous>, transform_indices = @transform_6, window_bounds = array<i64: 4, 1>}, {pipeline_mode = #tpu.pipeline_mode<synchronous>, transform_indices = @transform_7, window_bounds = array<i64: 4, 1>}, {pipeline_mode = #tpu.pipeline_mode<synchronous>, transform_indices = @transform_8, window_bounds = array<i64: 4, 1>}]} {
    %c0_i32 = arith.constant 0 : i32
    %0 = arith.cmpi eq, %arg0, %c0_i32 : i32
    %c0_i32_0 = arith.constant 0 : i32
    %1 = arith.cmpi eq, %arg1, %c0_i32_0 : i32
    %2 = arith.andi %0, %1 : i1
    %3 = arith.extui %2 : i1 to i32
    %c0_i32_1 = arith.constant 0 : i32
    %4 = arith.cmpi ne, %3, %c0_i32_1 : i32
    scf.if %4 {
      %cst_16 = arith.constant 0.000000e+00 : f32
      %22 = vector.broadcast %cst_16 : f32 to vector<4x1xf32>
      %c0_17 = arith.constant 0 : index
      %c0_18 = arith.constant 0 : index
      %23 = vector.load %arg11[%c0_17, %c0_18] : memref<4x1xf32, #tpu.memory_space<vmem>>, vector<4x1xf32>
      tpu.vector_store %arg11[%c0_17, %c0_18], %22 {strides = array<i32>} : memref<4x1xf32, #tpu.memory_space<vmem>>, vector<4x1xf32>,
      %cst_19 = arith.constant 0.000000e+00 : f32
      %24 = vector.broadcast %cst_19 : f32 to vector<4x1xf32>
      %c0_20 = arith.constant 0 : index
      %c0_21 = arith.constant 0 : index
      %25 = vector.load %arg12[%c0_20, %c0_21] : memref<4x1xf32, #tpu.memory_space<vmem>>, vector<4x1xf32>
      tpu.vector_store %arg12[%c0_20, %c0_21], %24 {strides = array<i32>} : memref<4x1xf32, #tpu.memory_space<vmem>>, vector<4x1xf32>,
    } else {
    }
    %c0 = arith.constant 0 : index
    %c0_2 = arith.constant 0 : index
    %c0_3 = arith.constant 0 : index
    %5 = vector.load %arg2[%c0, %c0_2, %c0_3] : memref<2x4x256xf32, #tpu.memory_space<vmem>>, vector<2x4x256xf32>
    %c0_4 = arith.constant 0 : index
    %c0_5 = arith.constant 0 : index
    %6 = vector.load %arg11[%c0_4, %c0_5] : memref<4x1xf32, #tpu.memory_space<vmem>>, vector<4x1xf32>
    %cst = arith.constant dense<0.000000e+00> : vector<4xf32>
    %7 = vector.multi_reduction <add>, %5, %cst [0, 2] : vector<2x4x256xf32> to vector<4xf32>
    %8 = vector.shape_cast %7 : vector<4xf32> to vector<4x1xf32>
    %9 = arith.addf %6, %8 : vector<4x1xf32>
    %c0_6 = arith.constant 0 : index
    %c0_7 = arith.constant 0 : index
    %10 = vector.load %arg11[%c0_6, %c0_7] : memref<4x1xf32, #tpu.memory_space<vmem>>, vector<4x1xf32>
    tpu.vector_store %arg11[%c0_6, %c0_7], %9 {strides = array<i32>} : memref<4x1xf32, #tpu.memory_space<vmem>>, vector<4x1xf32>,
    %c0_8 = arith.constant 0 : index
    %c0_9 = arith.constant 0 : index
    %11 = vector.load %arg12[%c0_8, %c0_9] : memref<4x1xf32, #tpu.memory_space<vmem>>, vector<4x1xf32>
    %12 = arith.mulf %5, %5 : vector<2x4x256xf32>
    %cst_10 = arith.constant dense<0.000000e+00> : vector<4xf32>
    %13 = vector.multi_reduction <add>, %12, %cst_10 [0, 2] : vector<2x4x256xf32> to vector<4xf32>
    %14 = vector.shape_cast %13 : vector<4xf32> to vector<4x1xf32>
    %15 = arith.addf %11, %14 : vector<4x1xf32>
    %c0_11 = arith.constant 0 : index
    %c0_12 = arith.constant 0 : index
    %16 = vector.load %arg12[%c0_11, %c0_12] : memref<4x1xf32, #tpu.memory_space<vmem>>, vector<4x1xf32>
    tpu.vector_store %arg12[%c0_11, %c0_12], %15 {strides = array<i32>} : memref<4x1xf32, #tpu.memory_space<vmem>>, vector<4x1xf32>,
    %c0_i32_13 = arith.constant 0 : i32
    %17 = arith.cmpi eq, %arg0, %c0_i32_13 : i32
    %c0_i32_14 = arith.constant 0 : i32
    %18 = arith.cmpi eq, %arg1, %c0_i32_14 : i32
    %19 = arith.andi %17, %18 : i1
    %20 = arith.extui %19 : i1 to i32
    %c0_i32_15 = arith.constant 0 : i32
    %21 = arith.cmpi ne, %20, %c0_i32_15 : i32
    scf.if %21 {
      %c0_16 = arith.constant 0 : index
      %c0_17 = arith.constant 0 : index
      %22 = vector.load %arg11[%c0_16, %c0_17] : memref<4x1xf32, #tpu.memory_space<vmem>>, vector<4x1xf32>
      %cst_18 = arith.constant 0.001953125 : f32
      %23 = vector.broadcast %cst_18 : f32 to vector<4x1xf32>
      %24 = arith.mulf %22, %23 : vector<4x1xf32>
      %c0_19 = arith.constant 0 : index
      %c0_20 = arith.constant 0 : index
      %25 = vector.load %arg12[%c0_19, %c0_20] : memref<4x1xf32, #tpu.memory_space<vmem>>, vector<4x1xf32>
      %cst_21 = arith.constant 0.001953125 : f32
      %26 = vector.broadcast %cst_21 : f32 to vector<4x1xf32>
      %27 = arith.mulf %25, %26 : vector<4x1xf32>
      %28 = arith.mulf %24, %24 : vector<4x1xf32>
      %29 = arith.subf %27, %28 : vector<4x1xf32>
      %cst_22 = arith.constant 0.000000e+00 : f32
      %30 = vector.broadcast %cst_22 : f32 to vector<4x1xf32>
      %31 = arith.maximumf %29, %30 : vector<4x1xf32>
      %c0_23 = arith.constant 0 : index
      %c0_24 = arith.constant 0 : index
      %32 = vector.load %arg3[%c0_23, %c0_24] : memref<4x1xf32, #tpu.memory_space<vmem>>, vector<4x1xf32>
      %cst_25 = arith.constant 9.99999974E-6 : f32
      %33 = vector.broadcast %cst_25 : f32 to vector<4x1xf32>
      %34 = arith.addf %31, %33 : vector<4x1xf32>
      %35 = math.rsqrt %34 : vector<4x1xf32>
      %36 = arith.mulf %32, %35 : vector<4x1xf32>
      %c0_26 = arith.constant 0 : index
      %c0_27 = arith.constant 0 : index
      %37 = vector.load %arg7[%c0_26, %c0_27] : memref<4x1xf32, #tpu.memory_space<vmem>>, vector<4x1xf32>
      tpu.vector_store %arg7[%c0_26, %c0_27], %36 {strides = array<i32>} : memref<4x1xf32, #tpu.memory_space<vmem>>, vector<4x1xf32>,
      %c0_28 = arith.constant 0 : index
      %c0_29 = arith.constant 0 : index
      %38 = vector.load %arg4[%c0_28, %c0_29] : memref<4x1xf32, #tpu.memory_space<vmem>>, vector<4x1xf32>
      %39 = arith.mulf %24, %36 : vector<4x1xf32>
      %40 = arith.subf %38, %39 : vector<4x1xf32>
      %c0_30 = arith.constant 0 : index
      %c0_31 = arith.constant 0 : index
      %41 = vector.load %arg8[%c0_30, %c0_31] : memref<4x1xf32, #tpu.memory_space<vmem>>, vector<4x1xf32>
      tpu.vector_store %arg8[%c0_30, %c0_31], %40 {strides = array<i32>} : memref<4x1xf32, #tpu.memory_space<vmem>>, vector<4x1xf32>,
      %c0_32 = arith.constant 0 : index
      %c0_33 = arith.constant 0 : index
      %42 = vector.load %arg5[%c0_32, %c0_33] : memref<4x1xf32, #tpu.memory_space<vmem>>, vector<4x1xf32>
      %cst_34 = arith.constant 0.899999976 : f32
      %43 = vector.broadcast %cst_34 : f32 to vector<4x1xf32>
      %44 = arith.mulf %43, %42 : vector<4x1xf32>
      %cst_35 = arith.constant 1.000000e-01 : f32
      %45 = vector.broadcast %cst_35 : f32 to vector<4x1xf32>
      %46 = arith.mulf %45, %24 : vector<4x1xf32>
      %47 = arith.addf %44, %46 : vector<4x1xf32>
      %c0_36 = arith.constant 0 : index
      %c0_37 = arith.constant 0 : index
      %48 = vector.load %arg9[%c0_36, %c0_37] : memref<4x1xf32, #tpu.memory_space<vmem>>, vector<4x1xf32>
      tpu.vector_store %arg9[%c0_36, %c0_37], %47 {strides = array<i32>} : memref<4x1xf32, #tpu.memory_space<vmem>>, vector<4x1xf32>,
      %c0_38 = arith.constant 0 : index
      %c0_39 = arith.constant 0 : index
      %49 = vector.load %arg6[%c0_38, %c0_39] : memref<4x1xf32, #tpu.memory_space<vmem>>, vector<4x1xf32>
      %cst_40 = arith.constant 0.899999976 : f32
      %50 = vector.broadcast %cst_40 : f32 to vector<4x1xf32>
      %51 = arith.mulf %50, %49 : vector<4x1xf32>
      %cst_41 = arith.constant 1.000000e-01 : f32
      %52 = vector.broadcast %cst_41 : f32 to vector<4x1xf32>
      %53 = arith.mulf %52, %31 : vector<4x1xf32>
      %54 = arith.addf %51, %53 : vector<4x1xf32>
      %c0_42 = arith.constant 0 : index
      %c0_43 = arith.constant 0 : index
      %55 = vector.load %arg10[%c0_42, %c0_43] : memref<4x1xf32, #tpu.memory_space<vmem>>, vector<4x1xf32>
      tpu.vector_store %arg10[%c0_42, %c0_43], %54 {strides = array<i32>} : memref<4x1xf32, #tpu.memory_space<vmem>>, vector<4x1xf32>,
    } else {
    }
    return
  }
  func.func @transform_0(%arg0: i32, %arg1: i32) -> (i32, i32, i32) {
    %c0_i32 = arith.constant 0 : i32
    %c0_i32_0 = arith.constant 0 : i32
    return %arg0, %c0_i32, %arg1 : i32, i32, i32
  }
  func.func @transform_1(%arg0: i32, %arg1: i32) -> (i32, i32) {
    %c0_i32 = arith.constant 0 : i32
    %c0_i32_0 = arith.constant 0 : i32
    %c0_i32_1 = arith.constant 0 : i32
    return %c0_i32, %c0_i32_0 : i32, i32
  }
  func.func @transform_2(%arg0: i32, %arg1: i32) -> (i32, i32) {
    %c0_i32 = arith.constant 0 : i32
    %c0_i32_0 = arith.constant 0 : i32
    %c0_i32_1 = arith.constant 0 : i32
    return %c0_i32, %c0_i32_0 : i32, i32
  }
  func.func @transform_3(%arg0: i32, %arg1: i32) -> (i32, i32) {
    %c0_i32 = arith.constant 0 : i32
    %c0_i32_0 = arith.constant 0 : i32
    %c0_i32_1 = arith.constant 0 : i32
    return %c0_i32, %c0_i32_0 : i32, i32
  }
  func.func @transform_4(%arg0: i32, %arg1: i32) -> (i32, i32) {
    %c0_i32 = arith.constant 0 : i32
    %c0_i32_0 = arith.constant 0 : i32
    %c0_i32_1 = arith.constant 0 : i32
    return %c0_i32, %c0_i32_0 : i32, i32
  }
  func.func @transform_5(%arg0: i32, %arg1: i32) -> (i32, i32) {
    %c0_i32 = arith.constant 0 : i32
    %c0_i32_0 = arith.constant 0 : i32
    %c0_i32_1 = arith.constant 0 : i32
    return %c0_i32, %c0_i32_0 : i32, i32
  }
  func.func @transform_6(%arg0: i32, %arg1: i32) -> (i32, i32) {
    %c0_i32 = arith.constant 0 : i32
    %c0_i32_0 = arith.constant 0 : i32
    %c0_i32_1 = arith.constant 0 : i32
    return %c0_i32, %c0_i32_0 : i32, i32
  }
  func.func @transform_7(%arg0: i32, %arg1: i32) -> (i32, i32) {
    %c0_i32 = arith.constant 0 : i32
    %c0_i32_0 = arith.constant 0 : i32
    %c0_i32_1 = arith.constant 0 : i32
    return %c0_i32, %c0_i32_0 : i32, i32
  }
  func.func @transform_8(%arg0: i32, %arg1: i32) -> (i32, i32) {
    %c0_i32 = arith.constant 0 : i32
    %c0_i32_0 = arith.constant 0 : i32
    %c0_i32_1 = arith.constant 0 : i32
    return %c0_i32, %c0_i32_0 : i32, i32
  }
}

</mosaic_0001>

<llo_original>
// kernel: tpu_custom_call.1
$region0: #{tpu_custom_call.1}
  #allocation0 [shape = 'u32[]', space=smem, size = 0x4, offset = 0x4, fixed_abs, tag = 'smem constant byte address 0x4 - core index']
  #allocation1 [shape = 'u32[144,128]{1,0:T(1,128)}', space=vmem, size = 0x12000, scoped, tag = 'internal scratch']
  #allocation2 [shape = 'f32[4,1]{1,0:T(4,128)}', space=vmem, size = 0x800, scoped, tag = 'scratch operand']
  #allocation3 [shape = 'f32[4,1]{1,0:T(4,128)}', space=vmem, size = 0x800, scoped, tag = 'scratch operand']
  %s0 = inlined_call_operand.vmem [shape: f32[2,4,256], index: 0, kind: input, shape index: {}]
  %s1 = inlined_call_operand.vmem [shape: f32[4,1], index: 1, kind: input, shape index: {}]
  %s2 = inlined_call_operand.vmem [shape: f32[4,1], index: 2, kind: input, shape index: {}]
  %s3 = inlined_call_operand.vmem [shape: f32[4,1], index: 3, kind: input, shape index: {}]
  %s4 = inlined_call_operand.vmem [shape: f32[4,1], index: 4, kind: input, shape index: {}]
  %s5 = inlined_call_operand.vmem [shape: f32[4,1], index: 5, kind: output, shape index: {0}]
  %s6 = inlined_call_operand.vmem [shape: f32[4,1], index: 6, kind: output, shape index: {1}]
  %s7 = inlined_call_operand.vmem [shape: f32[4,1], index: 7, kind: output, shape index: {2}]
  %s8 = inlined_call_operand.vmem [shape: f32[4,1], index: 8, kind: output, shape index: {3}]
  %9 = xla_tuple %s5, %s6, %s7, %s8
  %s10 = sld [smem:[#allocation0]]
  $region62: #{tpu_custom_call.1} parent=0
    _
  %s12 = ssub.s32 1, %s10
  %s13 = scalar_select 0, %s12, %s10
  // Predicated region
  $region2: #{tpu_custom_call.1} parent=0 // pred_check
    _
  $region3: #{tpu_custom_call.1} parent=0 // pred_check_branch
    %15 = sbr.rel (0) target = $region5
  $region4: #{tpu_custom_call.1} parent=0 // pred_region
    _
  $region5: #{tpu_custom_call.1} parent=0 // pred_fallthru
    _
  // Predicated region
  $region6: #{tpu_custom_call.1} parent=0 // pred_check
    _
  $region7: #{tpu_custom_call.1} parent=0 // pred_check_branch
    %17 = sbr.rel (0) target = $region9
  $region8: #{tpu_custom_call.1} parent=0 // pred_region
    _
  $region9: #{tpu_custom_call.1} parent=0 // pred_fallthru
    _
  // Predicated region
  $region10: #{tpu_custom_call.1} parent=0 // pred_check
    _
  $region11: #{tpu_custom_call.1} parent=0 // pred_check_branch
    %19 = sbr.rel (0) target = $region13
  $region12: #{tpu_custom_call.1} parent=0 // pred_region
    _
  $region13: #{tpu_custom_call.1} parent=0 // pred_fallthru
    _
  // Predicated region
  $region14: #{tpu_custom_call.1} parent=0 // pred_check
    _
  $region15: #{tpu_custom_call.1} parent=0 // pred_check_branch
    %21 = sbr.rel (0) target = $region17
  $region16: #{tpu_custom_call.1} parent=0 // pred_region
    _
  $region17: #{tpu_custom_call.1} parent=0 // pred_fallthru
    _
  // Predicated region
  $region18: #{tpu_custom_call.1} parent=0 // pred_check
    _
  $region19: #{tpu_custom_call.1} parent=0 // pred_check_branch
    %23 = sbr.rel (0) target = $region21
  $region20: #{tpu_custom_call.1} parent=0 // pred_region
    _
  $region21: #{tpu_custom_call.1} parent=0 // pred_fallthru
    _
  %p24 = scmp.eq.s32.totalorder 0, 0
  %p25 = scmp.eq.s32.totalorder 0, 0
  %p26 = pnand %p24, %p25
  %p27 = pneg %p26
  // Predicated region
  $region22: #{tpu_custom_call.1} parent=0 // pred_check
    _
  $region23: #{tpu_custom_call.1} parent=0 // pred_check_branch
    %29 = sbr.rel (%p26) target = $region25
  $region24: #{tpu_custom_call.1} parent=0 // pred_region
    %vm30 = vcmask 3072
    %31 = vst.msk [vmem:[#allocation2] sm:$0xf] %vm30, 0.0
    %32 = vst.msk [vmem:[#allocation3] sm:$0xf] %vm30, 0.0
  $region25: #{tpu_custom_call.1} parent=0 // pred_fallthru
    _
  %v33 = vld [vmem:[%s0] sm:$0xff]
  %v34 = vld [vmem:[%s0 + $0x8] sm:$0xff]
  %v35 = vld [vmem:[#allocation2] sm:$0xf]
  %v38 = vcombine.high %v33, %v33
  %v39 = vcombine.high %v34, %v34
  %vm42 = vcmask 1043456
  %v43 = vsel %vm42, %v33, 0.0
  %v44 = vsel %vm42, %v38, 0.0
  %v45 = vadd.f32 %v43, %v44
  %v46 = vsel %vm42, %v34, 0.0
  %v47 = vadd.f32 %v45, %v46
  %v48 = vsel %vm42, %v39, 0.0
  %v49 = vadd.f32 %v47, %v48
  %50 = vadd.xlane.f32.xlu0 %v49
  %v51 = vpop.xlane.xlu0 %50
  %v52 = vadd.f32 %v35, %v51
  %vm53 = vcmask 3072
  %54 = vst.msk [vmem:[#allocation2] sm:$0xf] %vm53, %v52
  %v55 = vld [vmem:[#allocation3] sm:$0xf]
  %v56 = vmul.f32 %v33, %v33
  %v57 = vmul.f32 %v34, %v34
  %v60 = vcombine.high %v56, %v56
  %v61 = vcombine.high %v57, %v57
  %v64 = vsel %vm42, %v56, 0.0
  %v65 = vsel %vm42, %v60, 0.0
  %v66 = vadd.f32 %v64, %v65
  %v67 = vsel %vm42, %v57, 0.0
  %v68 = vadd.f32 %v66, %v67
  %v69 = vsel %vm42, %v61, 0.0
  %v70 = vadd.f32 %v68, %v69
  %71 = vadd.xlane.f32.xlu0 %v70
  %v72 = vpop.xlane.xlu0 %71
  %v73 = vadd.f32 %v55, %v72
  %74 = vst.msk [vmem:[#allocation3] sm:$0xf] %vm53, %v73
  // Predicated region
  $region26: #{tpu_custom_call.1} parent=0 // pred_check
    _
  $region27: #{tpu_custom_call.1} parent=0 // pred_check_branch
    %76 = sbr.rel (%p26) target = $region29
  $region28: #{tpu_custom_call.1} parent=0 // pred_region
    %v77 = vld [vmem:[#allocation2] sm:$0xf]
    %v78 = vmul.f32 %v77, 0.001953125
    %v79 = vld [vmem:[#allocation3] sm:$0xf]
    %v80 = vmul.f32 %v79, 0.001953125
    %v81 = vmul.f32 %v78, %v78
    %v82 = vsub.f32 %v80, %v81
    %v83 = vmax.f32 %v82, 0.0
    %v84 = vld [vmem:[%s1] sm:$0xf]
    %v85 = vadd.f32 %v83, 1e-05
    %v86 = vrsqrt.pop %v85
    %v87 = vmul.f32 %v84, %v86
    %88 = vst.msk [vmem:[%s5] sm:$0xf] %vm53, %v87
    %v89 = vld [vmem:[%s2] sm:$0xf]
    %v90 = vmul.f32 %v78, %v87
    %v91 = vsub.f32 %v89, %v90
    %92 = vst.msk [vmem:[%s6] sm:$0xf] %vm53, %v91
    %v93 = vld [vmem:[%s3] sm:$0xf]
    %v94 = vmul.f32 %v93, 0.9
    %v95 = vmul.f32 %v78, 0.1
    %v96 = vadd.f32 %v94, %v95
    %97 = vst.msk [vmem:[%s7] sm:$0xf] %vm53, %v96
    %v98 = vld [vmem:[%s4] sm:$0xf]
    %v99 = vmul.f32 %v98, 0.9
    %v100 = vmul.f32 %v83, 0.1
    %v101 = vadd.f32 %v99, %v100
    %102 = vst.msk [vmem:[%s8] sm:$0xf] %vm53, %v101
  $region29: #{tpu_custom_call.1} parent=0 // pred_fallthru
    _
  // Predicated region
  $region30: #{tpu_custom_call.1} parent=0 // pred_check
    _
  $region31: #{tpu_custom_call.1} parent=0 // pred_check_branch
    %104 = sbr.rel (0) target = $region33
  $region32: #{tpu_custom_call.1} parent=0 // pred_region
    _
  $region33: #{tpu_custom_call.1} parent=0 // pred_fallthru
    _
  // Predicated region
  $region34: #{tpu_custom_call.1} parent=0 // pred_check
    _
  $region35: #{tpu_custom_call.1} parent=0 // pred_check_branch
    %106 = sbr.rel (0) target = $region37
  $region36: #{tpu_custom_call.1} parent=0 // pred_region
    _
  $region37: #{tpu_custom_call.1} parent=0 // pred_fallthru
    _
  // Predicated region
  $region38: #{tpu_custom_call.1} parent=0 // pred_check
    _
  $region39: #{tpu_custom_call.1} parent=0 // pred_check_branch
    %108 = sbr.rel (0) target = $region41
  $region40: #{tpu_custom_call.1} parent=0 // pred_region
    _
  $region41: #{tpu_custom_call.1} parent=0 // pred_fallthru
    _
  // Predicated region
  $region42: #{tpu_custom_call.1} parent=0 // pred_check
    _
  $region43: #{tpu_custom_call.1} parent=0 // pred_check_branch
    %110 = sbr.rel (0) target = $region45
  $region44: #{tpu_custom_call.1} parent=0 // pred_region
    _
  $region45: #{tpu_custom_call.1} parent=0 // pred_fallthru
    _
  // Predicated region
  $region46: #{tpu_custom_call.1} parent=0 // pred_check
    _
  $region47: #{tpu_custom_call.1} parent=0 // pred_check_branch
    %112 = sbr.rel (0) target = $region49
  $region48: #{tpu_custom_call.1} parent=0 // pred_region
    _
  $region49: #{tpu_custom_call.1} parent=0 // pred_fallthru
    _
  // Predicated region
  $region50: #{tpu_custom_call.1} parent=0 // pred_check
    _
  $region51: #{tpu_custom_call.1} parent=0 // pred_check_branch
    %114 = sbr.rel (0) target = $region53
  $region52: #{tpu_custom_call.1} parent=0 // pred_region
    _
  $region53: #{tpu_custom_call.1} parent=0 // pred_fallthru
    _
  // Predicated region
  $region54: #{tpu_custom_call.1} parent=0 // pred_check
    _
  $region55: #{tpu_custom_call.1} parent=0 // pred_check_branch
    %116 = sbr.rel (0) target = $region57
  $region56: #{tpu_custom_call.1} parent=0 // pred_region
    _
  $region57: #{tpu_custom_call.1} parent=0 // pred_fallthru
    _
  // Predicated region
  $region58: #{tpu_custom_call.1} parent=0 // pred_check
    _
  $region59: #{tpu_custom_call.1} parent=0 // pred_check_branch
    %118 = sbr.rel (0) target = $region61
  $region60: #{tpu_custom_call.1} parent=0 // pred_region
    _
  $region61: #{tpu_custom_call.1} parent=0 // pred_fallthru
    _

</llo_original>
